<compile_context>
chip_gen: v5e
topology: v5e:2x2
jax: 0.10.0
libtpu: 0.0.40
codegen_flags: <defaults>
</compile_context>

<pallas_src>
import jax
import jax.numpy as jnp
from jax import lax
from jax.experimental import pallas as pl
from jax.experimental.pallas import tpu as pltpu


_BCE_CLAMP = 100.0                    # torch BCELoss clamps log terms at -100
_VMEM_BUDGET = 20 * 1024 * 1024       # headroom under v7x's 32 MiB scoped VMEM
_VMEM_LIMIT = 32 * 1024 * 1024


def _round_up(n, m):
    return ((n + m - 1) // m) * m


def _pick_tile(n, requested, bytes_per_row):
    """8-aligned row tile: big enough to amortize grid-step overhead, small enough
    for the VMEM budget, and >=2 grid steps when possible (v7x has 2 TensorCores)."""
    cap = max(8, (_VMEM_BUDGET // max(bytes_per_row, 1)) // 8 * 8)
    t = min(int(requested), cap, _round_up(n, 8))
    t = max(8, (t // 8) * 8)
    if pl.cdiv(n, t) == 1 and n > 8:
        t = _round_up(pl.cdiv(n, 2), 8)
    return int(t)


def _softplus(x):
    # Stable log(1 + exp(x)); one exp + one log (EUP) instead of sigmoid-then-log.
    return jnp.maximum(x, 0.0) + jnp.log(1.0 + jnp.exp(-jnp.abs(x)))


# ----------------------------------------------------------------------------
# Kernel 1: fused per-edge decoder + BCE + BPR, reduced to per-tile partial sums
# ----------------------------------------------------------------------------
def _edge_losses(anc, pos, neg, w1_t, b1_row, w2_row, b2_scalar, *, tb_req=512):
    B, H = anc.shape
    tb = _pick_tile(B, tb_req, bytes_per_row=56 * H)
    n_tiles = pl.cdiv(B, tb)

    def kernel(anc_ref, pos_ref, neg_ref, w1_ref, b1_ref, w2_ref, b2_ref, out_ref):
        i = pl.program_id(0)
        row = lax.broadcasted_iota(jnp.int32, (tb, 1), 0)
        valid = (i * tb + row) < B                         # mask ragged last tile

        anc_v = anc_ref[...]
        prod_pos = jnp.where(valid, anc_v * pos_ref[...], 0.0)
        prod_neg = jnp.where(valid, anc_v * neg_ref[...], 0.0)

        # BPR term: -log(sigmoid(<anc,pos> - <anc,neg>)) == softplus(-diff)
        score_diff = jnp.sum(prod_pos - prod_neg, axis=-1, keepdims=True)
        bpr_sum = jnp.sum(jnp.where(valid, _softplus(-score_diff), 0.0))

        # Fused decoder for pos+neg edges: one (2*tb, H) @ (H, H) MXU call.
        prod = jnp.concatenate([prod_pos, prod_neg], axis=0)           # (2tb, H)
        h = jnp.maximum(prod, 0.0)                                     # ReLU
        h = jnp.dot(h, w1_ref[...], preferred_element_type=jnp.float32) + b1_ref[...]
        h = jnp.maximum(h, 0.0)                                        # ReLU
        # Linear(H, 1): broadcast-mul + lane reduction (no Nx1 matmul)
        s = jnp.sum(h * w2_ref[...], axis=-1, keepdims=True) + b2_ref[...]  # (2tb,1)

        row2 = lax.broadcasted_iota(jnp.int32, (2 * tb, 1), 0)
        is_pos = row2 < tb
        # BCE(sigmoid(s),1)=softplus(-s); BCE(sigmoid(s),0)=softplus(s); clamp at 100.
        bce = jnp.minimum(_softplus(jnp.where(is_pos, -s, s)), _BCE_CLAMP)
        edge = jnp.where(is_pos, row2, row2 - tb)
        valid2 = (i * tb + edge) < B
        rec_sum = jnp.sum(jnp.where(valid2, bce, 0.0))

        # Lane-dense (8,128) output block with the two partial sums at [0,0]/[0,1].
        sub = lax.broadcasted_iota(jnp.int32, (8, 128), 0)
        lane = lax.broadcasted_iota(jnp.int32, (8, 128), 1)
        blk = jnp.where((sub == 0) & (lane == 0), rec_sum, 0.0)
        blk = jnp.where((sub == 0) & (lane == 1), bpr_sum, blk)
        out_ref[...] = blk

    edge_spec = pl.BlockSpec((tb, H), lambda i: (i, 0))

    def resident(shape):   # constant block index -> weights stay VMEM-resident
        return pl.BlockSpec(shape, lambda i: (0, 0))

    cost = pl.CostEstimate(
        flops=int(B) * (4 * H * H + 20 * H),
        transcendentals=int(B) * 6,
        bytes_accessed=4 * (3 * B * H + H * H + 3 * H + 1 + n_tiles * 8 * 128),
    )

    out = pl.pallas_call(
        kernel,
        out_shape=jax.ShapeDtypeStruct((n_tiles * 8, 128), jnp.float32),
        grid_spec=pltpu.PrefetchScalarGridSpec(
            num_scalar_prefetch=0,
            grid=(n_tiles,),
            in_specs=[edge_spec, edge_spec, edge_spec,
                      resident((H, H)), resident((1, H)),
                      resident((1, H)), resident((1, 1))],
            out_specs=pl.BlockSpec((8, 128), lambda i: (i, 0)),
        ),
        compiler_params=pltpu.CompilerParams(
            dimension_semantics=("parallel",),
            vmem_limit_bytes=_VMEM_LIMIT),
        cost_estimate=cost,
    )(anc, pos, neg, w1_t, b1_row, w2_row, b2_scalar)

    return jnp.sum(out[:, 0]), jnp.sum(out[:, 1])      # (rec_sum, bpr_sum)


# ----------------------------------------------------------------------------
# Kernel 2: KL divergence, reduced to per-tile partial sums
# ----------------------------------------------------------------------------
def _kl_sum(x_mean, x_std, *, tr_req=1024):
    N, H = x_mean.shape
    tr = _pick_tile(N, tr_req, bytes_per_row=24 * H)
    n_tiles = pl.cdiv(N, tr)

    def kernel(mean_ref, std_ref, out_ref):
        i = pl.program_id(0)
        row = lax.broadcasted_iota(jnp.int32, (tr, 1), 0)
        valid = (i * tr + row) < N
        m = jnp.where(valid, mean_ref[...], 0.0)
        s = jnp.where(valid, std_ref[...], 1.0)       # masked rows contribute 0
        term = 1.0 + 2.0 * jnp.log(s) - m * m - s * s
        kl_part = -0.5 * jnp.sum(term)
        sub = lax.broadcasted_iota(jnp.int32, (8, 128), 0)
        lane = lax.broadcasted_iota(jnp.int32, (8, 128), 1)
        out_ref[...] = jnp.where((sub == 0) & (lane == 0), kl_part, 0.0)

    out = pl.pallas_call(
        kernel,
        out_shape=jax.ShapeDtypeStruct((n_tiles * 8, 128), jnp.float32),
        grid_spec=pltpu.PrefetchScalarGridSpec(
            num_scalar_prefetch=0,
            grid=(n_tiles,),
            in_specs=[pl.BlockSpec((tr, H), lambda i: (i, 0)),
                      pl.BlockSpec((tr, H), lambda i: (i, 0))],
            out_specs=pl.BlockSpec((8, 128), lambda i: (i, 0)),
        ),
        compiler_params=pltpu.CompilerParams(
            dimension_semantics=("parallel",),
            vmem_limit_bytes=_VMEM_LIMIT),
    )(x_mean, x_std)
    return jnp.sum(out[:, 0])


# ----------------------------------------------------------------------------
# Full forward (loss), matching vgae_decoder.forward
# ----------------------------------------------------------------------------
def vgae_decoder_forward(x, x_mean, x_std, users, items, neg_items,
                         encoder_params, dec_w1, dec_b1, dec_w2, dec_b2,
                         *, n_user, n_item, batch, reg, beta=0.1,
                         tb=512, tr=1024):
    f32 = jnp.float32
    x = x.astype(f32)
    x_user = x[:n_user]
    x_item = x[n_user:n_user + n_item]
    H = x.shape[1]

    # Gathers stay in plain JAX; no padding copies (ragged tails masked in-kernel).
    anc = jnp.take(x_user, users, axis=0)
    pos = jnp.take(x_item, items, axis=0)
    neg = jnp.take(x_item, neg_items, axis=0)

    w1_t = dec_w1.astype(f32).T                 # torch (out,in) -> (in,out) for x @ W^T
    b1_row = dec_b1.astype(f32).reshape(1, H)
    w2_row = dec_w2.astype(f32).reshape(1, H)   # Linear(H,1) weight, torch layout
    b2_s = dec_b2.astype(f32).reshape(1, 1)

    rec_sum, bpr_sum = _edge_losses(anc, pos, neg, w1_t, b1_row, w2_row, b2_s,
                                    tb_req=tb)
    kl_total = _kl_sum(x_mean.astype(f32), x_std.astype(f32), tr_req=tr)

    B = users.shape[0]
    N = x_mean.shape[0]
    loss_rec_mean = rec_sum / B
    bpr_loss = bpr_sum / batch
    kl_mean = kl_total / N
    # calcRegLoss(encoder) * reg: sum of squared L2 norms of encoder parameters.
    reg_loss = reg * sum(jnp.sum(p.astype(f32) ** 2) for p in encoder_params)

    return loss_rec_mean + beta * kl_mean + bpr_loss + reg_loss


# ----------------------------------------------------------------------------
# Pure-JAX reference for verification
# ----------------------------------------------------------------------------
def _reference_loss(x, x_mean, x_std, users, items, neg_items,
                    encoder_params, w1, b1, w2, b2,
                    *, n_user, n_item, batch, reg, beta=0.1):
    x_user = x[:n_user]
    x_item = x[n_user:n_user + n_item]
    anc, pos, neg = x_user[users], x_item[items], x_item[neg_items]

    def dec(p):
        h = jnp.maximum(p, 0.0)
        h = h @ w1.T + b1
        h = jnp.maximum(h, 0.0)
        return h @ w2.T + b2

    pred_pos = jax.nn.sigmoid(dec(anc * pos))
    pred_neg = jax.nn.sigmoid(dec(anc * neg))
    loss_rec = -jnp.log(pred_pos) - jnp.log(1.0 - pred_neg)
    kl = -0.5 * jnp.sum(1.0 + 2.0 * jnp.log(x_std) - x_mean ** 2 - x_std ** 2, axis=1)
    score_diff = jnp.sum(anc * pos, axis=-1) - jnp.sum(anc * neg, axis=-1)
    bpr = -jnp.sum(jnp.log(jax.nn.sigmoid(score_diff))) / batch
    reg_l = reg * sum(jnp.sum(p ** 2) for p in encoder_params)
    return jnp.mean(loss_rec) + beta * jnp.mean(kl) + bpr + reg_l


if __name__ == "__main__":
    key = jax.random.PRNGKey(0)
    keys = jax.random.split(key, 12)

    n_user, n_item, hidden, batch = 48, 80, 32, 64
    n_nodes = n_user + n_item
    reg, beta = 1e-4, 0.1

    x = jax.random.normal(keys[0], (n_nodes, hidden), dtype=jnp.float32)
    x_mean = jax.random.normal(keys[1], (n_nodes, hidden), dtype=jnp.float32)
    x_std = (jax.nn.softplus(jax.random.normal(keys[2], (n_nodes, hidden))) + 1e-3
             ).astype(jnp.float32)

    users = jax.random.randint(keys[3], (batch,), 0, n_user)
    items = jax.random.randint(keys[4], (batch,), 0, n_item)
    neg_items = jax.random.randint(keys[5], (batch,), 0, n_item)

    # Decoder parameters in torch Linear layout: weight (out_features, in_features).
    dec_w1 = jax.random.normal(keys[6], (hidden, hidden), dtype=jnp.float32) * 0.1
    dec_b1 = jax.random.normal(keys[7], (hidden,), dtype=jnp.float32) * 0.1
    dec_w2 = jax.random.normal(keys[8], (1, hidden), dtype=jnp.float32) * 0.1
    dec_b2 = jax.random.normal(keys[9], (1,), dtype=jnp.float32) * 0.1

    # Stand-in "encoder" parameters (only used for the L2 regularization term).
    encoder_params = (
        jax.random.normal(keys[10], (hidden, hidden), dtype=jnp.float32) * 0.1,
        jax.random.normal(keys[11], (n_nodes, hidden), dtype=jnp.float32) * 0.1,
    )

    loss = vgae_decoder_forward(
        x, x_mean, x_std, users, items, neg_items,
        encoder_params, dec_w1, dec_b1, dec_w2, dec_b2,
        n_user=n_user, n_item=n_item, batch=batch, reg=reg, beta=beta)
    loss = jax.block_until_ready(loss)

    ref = _reference_loss(
        x, x_mean, x_std, users, items, neg_items,
        encoder_params, dec_w1, dec_b1, dec_w2, dec_b2,
        n_user=n_user, n_item=n_item, batch=batch, reg=reg, beta=beta)

    assert loss.shape == ()
    assert bool(jnp.isfinite(loss))
    assert jnp.allclose(loss, ref, atol=1e-4, rtol=1e-4), (float(loss), float(ref))

    print("KERNEL_OK")
</pallas_src>

<mosaic_0001>
module attributes {stable_mosaic.version = 11 : i64} {
  func.func @kernel(%arg0: i32, %arg1: memref<32x32xf32, #tpu.memory_space<vmem>>, %arg2: memref<32x32xf32, #tpu.memory_space<vmem>>, %arg3: memref<32x32xf32, #tpu.memory_space<vmem>>, %arg4: memref<32x32xf32, #tpu.memory_space<vmem>>, %arg5: memref<1x32xf32, #tpu.memory_space<vmem>>, %arg6: memref<1x32xf32, #tpu.memory_space<vmem>>, %arg7: memref<1x1xf32, #tpu.memory_space<vmem>>, %arg8: memref<8x128xf32, #tpu.memory_space<vmem>>) attributes {dimension_semantics = [#tpu.dimension_semantics<parallel>], iteration_bounds = array<i64: 2>, scalar_prefetch = 0 : i64, scratch_operands = 0 : i64, tpu.core_type = #tpu.core_type<tc>, window_params = [{transform_indices = @transform_0, window_bounds = array<i64: 32, 32>}, {transform_indices = @transform_1, window_bounds = array<i64: 32, 32>}, {transform_indices = @transform_2, window_bounds = array<i64: 32, 32>}, {pipeline_mode = #tpu.pipeline_mode<synchronous>, transform_indices = @transform_3, window_bounds = array<i64: 32, 32>}, {pipeline_mode = #tpu.pipeline_mode<synchronous>, transform_indices = @transform_4, window_bounds = array<i64: 1, 32>}, {pipeline_mode = #tpu.pipeline_mode<synchronous>, transform_indices = @transform_5, window_bounds = array<i64: 1, 32>}, {pipeline_mode = #tpu.pipeline_mode<synchronous>, transform_indices = @transform_6, window_bounds = array<i64: 1, 1>}, {transform_indices = @transform_7, window_bounds = array<i64: 8, 128>}]} {
    %0 = tpu.iota {dimensions = array<i32: 0>} : vector<32x1xi32>
    %c32_i32 = arith.constant 32 : i32
    %1 = arith.muli %arg0, %c32_i32 : i32
    %2 = vector.broadcast %1 : i32 to vector<32x1xi32>
    %3 = arith.addi %2, %0 : vector<32x1xi32>
    %c64_i32 = arith.constant 64 : i32
    %4 = vector.broadcast %c64_i32 : i32 to vector<32x1xi32>
    %5 = arith.cmpi slt, %3, %4 : vector<32x1xi32>
    %c0 = arith.constant 0 : index
    %c0_0 = arith.constant 0 : index
    %6 = vector.load %arg1[%c0, %c0_0] : memref<32x32xf32, #tpu.memory_space<vmem>>, vector<32x32xf32>
    %c0_1 = arith.constant 0 : index
    %c0_2 = arith.constant 0 : index
    %7 = vector.load %arg2[%c0_1, %c0_2] : memref<32x32xf32, #tpu.memory_space<vmem>>, vector<32x32xf32>
    %8 = arith.mulf %6, %7 : vector<32x32xf32>
    %cst = arith.constant 0.000000e+00 : f32
    %9 = vector.shape_cast %5 : vector<32x1xi1> to vector<32x1xi1>
    %10 = vector.broadcast %9 : vector<32x1xi1> to vector<32x32xi1>
    %11 = vector.broadcast %cst : f32 to vector<32x32xf32>
    %12 = arith.select %10, %8, %11 : vector<32x32xi1>, vector<32x32xf32>
    %c0_3 = arith.constant 0 : index
    %c0_4 = arith.constant 0 : index
    %13 = vector.load %arg3[%c0_3, %c0_4] : memref<32x32xf32, #tpu.memory_space<vmem>>, vector<32x32xf32>
    %14 = arith.mulf %6, %13 : vector<32x32xf32>
    %cst_5 = arith.constant 0.000000e+00 : f32
    %15 = vector.shape_cast %5 : vector<32x1xi1> to vector<32x1xi1>
    %16 = vector.broadcast %15 : vector<32x1xi1> to vector<32x32xi1>
    %17 = vector.broadcast %cst_5 : f32 to vector<32x32xf32>
    %18 = arith.select %16, %14, %17 : vector<32x32xi1>, vector<32x32xf32>
    %19 = arith.subf %12, %18 : vector<32x32xf32>
    %cst_6 = arith.constant dense<0.000000e+00> : vector<32xf32>
    %20 = vector.multi_reduction <add>, %19, %cst_6 [1] : vector<32x32xf32> to vector<32xf32>
    %21 = vector.shape_cast %20 : vector<32xf32> to vector<32x1xf32>
    %cst_7 = arith.constant 0.000000e+00 : f32
    %22 = vector.broadcast %cst_7 : f32 to vector<32x1xf32>
    %23 = arith.subf %22, %21 : vector<32x1xf32>
    %cst_8 = arith.constant 0.000000e+00 : f32
    %24 = vector.broadcast %cst_8 : f32 to vector<32x1xf32>
    %25 = arith.maximumf %23, %24 : vector<32x1xf32>
    %26 = math.absf %23 : vector<32x1xf32>
    %cst_9 = arith.constant 0.000000e+00 : f32
    %27 = vector.broadcast %cst_9 : f32 to vector<32x1xf32>
    %28 = arith.subf %27, %26 : vector<32x1xf32>
    %29 = math.exp %28 : vector<32x1xf32>
    %cst_10 = arith.constant 1.000000e+00 : f32
    %30 = vector.broadcast %cst_10 : f32 to vector<32x1xf32>
    %31 = arith.addf %30, %29 : vector<32x1xf32>
    %32 = math.log %31 : vector<32x1xf32>
    %33 = arith.addf %25, %32 : vector<32x1xf32>
    %cst_11 = arith.constant 0.000000e+00 : f32
    %34 = vector.broadcast %cst_11 : f32 to vector<32x1xf32>
    %35 = arith.select %5, %33, %34 : vector<32x1xi1>, vector<32x1xf32>
    %36 = vector.shape_cast %35 : vector<32x1xf32> to vector<1x32x1xf32>
    %cst_12 = arith.constant dense<0.000000e+00> : vector<1xf32>
    %37 = vector.multi_reduction <add>, %36, %cst_12 [1, 2] : vector<1x32x1xf32> to vector<1xf32>
    %38 = vector.shape_cast %37 : vector<1xf32> to vector<1x1x1xf32>
    %39 = vector.extract %38[0, 0, 0] : f32 from vector<1x1x1xf32>
    %40 = tpu.concatenate %12, %18 in 0 : vector<32x32xf32>, vector<32x32xf32> -> vector<64x32xf32>
    %cst_13 = arith.constant 0.000000e+00 : f32
    %41 = vector.broadcast %cst_13 : f32 to vector<64x32xf32>
    %42 = arith.maximumf %40, %41 : vector<64x32xf32>
    %c0_14 = arith.constant 0 : index
    %c0_15 = arith.constant 0 : index
    %43 = vector.load %arg4[%c0_14, %c0_15] : memref<32x32xf32, #tpu.memory_space<vmem>>, vector<32x32xf32>
    %cst_16 = arith.constant dense<0.000000e+00> : vector<64x32xf32>
    %44 = tpu.matmul %42, %43, %cst_16 {dimension_numbers = #tpu.dot_dimension_numbers<[1], [0], [0], [1], [0, 0, 1, 1], [], []>} : vector<64x32xf32>, vector<32x32xf32>, vector<64x32xf32> -> vector<64x32xf32>
    %c0_17 = arith.constant 0 : index
    %c0_18 = arith.constant 0 : index
    %45 = vector.load %arg5[%c0_17, %c0_18] : memref<1x32xf32, #tpu.memory_space<vmem>>, vector<1x32xf32>
    %46 = vector.broadcast %45 : vector<1x32xf32> to vector<64x32xf32>
    %47 = arith.addf %44, %46 : vector<64x32xf32>
    %cst_19 = arith.constant 0.000000e+00 : f32
    %48 = vector.broadcast %cst_19 : f32 to vector<64x32xf32>
    %49 = arith.maximumf %47, %48 : vector<64x32xf32>
    %c0_20 = arith.constant 0 : index
    %c0_21 = arith.constant 0 : index
    %50 = vector.load %arg6[%c0_20, %c0_21] : memref<1x32xf32, #tpu.memory_space<vmem>>, vector<1x32xf32>
    %51 = vector.broadcast %50 : vector<1x32xf32> to vector<64x32xf32>
    %52 = arith.mulf %49, %51 : vector<64x32xf32>
    %cst_22 = arith.constant dense<0.000000e+00> : vector<64xf32>
    %53 = vector.multi_reduction <add>, %52, %cst_22 [1] : vector<64x32xf32> to vector<64xf32>
    %54 = vector.shape_cast %53 : vector<64xf32> to vector<64x1xf32>
    %c0_23 = arith.constant 0 : index
    %c0_24 = arith.constant 0 : index
    %55 = vector.load %arg7[%c0_23, %c0_24] : memref<1x1xf32, #tpu.memory_space<vmem>>, vector<1x1xf32>
    %56 = vector.broadcast %55 : vector<1x1xf32> to vector<64x1xf32>
    %57 = arith.addf %54, %56 : vector<64x1xf32>
    %58 = tpu.iota {dimensions = array<i32: 0>} : vector<64x1xi32>
    %c32_i32_25 = arith.constant 32 : i32
    %59 = vector.broadcast %c32_i32_25 : i32 to vector<64x1xi32>
    %60 = arith.cmpi slt, %58, %59 : vector<64x1xi32>
    %cst_26 = arith.constant 0.000000e+00 : f32
    %61 = vector.broadcast %cst_26 : f32 to vector<64x1xf32>
    %62 = arith.subf %61, %57 : vector<64x1xf32>
    %63 = arith.select %60, %62, %57 : vector<64x1xi1>, vector<64x1xf32>
    %cst_27 = arith.constant 0.000000e+00 : f32
    %64 = vector.broadcast %cst_27 : f32 to vector<64x1xf32>
    %65 = arith.maximumf %63, %64 : vector<64x1xf32>
    %66 = math.absf %63 : vector<64x1xf32>
    %cst_28 = arith.constant 0.000000e+00 : f32
    %67 = vector.broadcast %cst_28 : f32 to vector<64x1xf32>
    %68 = arith.subf %67, %66 : vector<64x1xf32>
    %69 = math.exp %68 : vector<64x1xf32>
    %cst_29 = arith.constant 1.000000e+00 : f32
    %70 = vector.broadcast %cst_29 : f32 to vector<64x1xf32>
    %71 = arith.addf %70, %69 : vector<64x1xf32>
    %72 = math.log %71 : vector<64x1xf32>
    %73 = arith.addf %65, %72 : vector<64x1xf32>
    %cst_30 = arith.constant 1.000000e+02 : f32
    %74 = vector.broadcast %cst_30 : f32 to vector<64x1xf32>
    %75 = arith.minimumf %73, %74 : vector<64x1xf32>
    %c32_i32_31 = arith.constant 32 : i32
    %76 = vector.broadcast %c32_i32_31 : i32 to vector<64x1xi32>
    %77 = arith.subi %58, %76 : vector<64x1xi32>
    %78 = arith.select %60, %58, %77 : vector<64x1xi1>, vector<64x1xi32>
    %c32_i32_32 = arith.constant 32 : i32
    %79 = arith.muli %arg0, %c32_i32_32 : i32
    %80 = vector.broadcast %79 : i32 to vector<64x1xi32>
    %81 = arith.addi %80, %78 : vector<64x1xi32>
    %c64_i32_33 = arith.constant 64 : i32
    %82 = vector.broadcast %c64_i32_33 : i32 to vector<64x1xi32>
    %83 = arith.cmpi slt, %81, %82 : vector<64x1xi32>
    %cst_34 = arith.constant 0.000000e+00 : f32
    %84 = vector.broadcast %cst_34 : f32 to vector<64x1xf32>
    %85 = arith.select %83, %75, %84 : vector<64x1xi1>, vector<64x1xf32>
    %86 = vector.shape_cast %85 : vector<64x1xf32> to vector<1x64x1xf32>
    %cst_35 = arith.constant dense<0.000000e+00> : vector<1xf32>
    %87 = vector.multi_reduction <add>, %86, %cst_35 [1, 2] : vector<1x64x1xf32> to vector<1xf32>
    %88 = vector.shape_cast %87 : vector<1xf32> to vector<1x1x1xf32>
    %89 = vector.extract %88[0, 0, 0] : f32 from vector<1x1x1xf32>
    %90 = tpu.iota {dimensions = array<i32: 0>} : vector<8x128xi32>
    %91 = tpu.iota {dimensions = array<i32: 1>} : vector<8x128xi32>
    %c0_i32 = arith.constant 0 : i32
    %92 = vector.broadcast %c0_i32 : i32 to vector<8x128xi32>
    %93 = arith.cmpi eq, %90, %92 : vector<8x128xi32>
    %c0_i32_36 = arith.constant 0 : i32
    %94 = vector.broadcast %c0_i32_36 : i32 to vector<8x128xi32>
    %95 = arith.cmpi eq, %91, %94 : vector<8x128xi32>
    %96 = arith.andi %93, %95 : vector<8x128xi1>
    %cst_37 = arith.constant 0.000000e+00 : f32
    %97 = vector.broadcast %89 : f32 to vector<8x128xf32>
    %98 = vector.broadcast %cst_37 : f32 to vector<8x128xf32>
    %99 = arith.select %96, %97, %98 : vector<8x128xi1>, vector<8x128xf32>
    %c0_i32_38 = arith.constant 0 : i32
    %100 = vector.broadcast %c0_i32_38 : i32 to vector<8x128xi32>
    %101 = arith.cmpi eq, %90, %100 : vector<8x128xi32>
    %c1_i32 = arith.constant 1 : i32
    %102 = vector.broadcast %c1_i32 : i32 to vector<8x128xi32>
    %103 = arith.cmpi eq, %91, %102 : vector<8x128xi32>
    %104 = arith.andi %101, %103 : vector<8x128xi1>
    %105 = vector.broadcast %39 : f32 to vector<8x128xf32>
    %106 = arith.select %104, %105, %99 : vector<8x128xi1>, vector<8x128xf32>
    %c0_39 = arith.constant 0 : index
    %c0_40 = arith.constant 0 : index
    %107 = vector.load %arg8[%c0_39, %c0_40] : memref<8x128xf32, #tpu.memory_space<vmem>>, vector<8x128xf32>
    tpu.vector_store %arg8[%c0_39, %c0_40], %106 {strides = array<i32>} : memref<8x128xf32, #tpu.memory_space<vmem>>, vector<8x128xf32>,
    return
  }
  func.func @transform_0(%arg0: i32) -> (i32, i32) {
    %c0_i32 = arith.constant 0 : i32
    %c0_i32_0 = arith.constant 0 : i32
    return %arg0, %c0_i32 : i32, i32
  }
  func.func @transform_1(%arg0: i32) -> (i32, i32) {
    %c0_i32 = arith.constant 0 : i32
    %c0_i32_0 = arith.constant 0 : i32
    return %arg0, %c0_i32 : i32, i32
  }
  func.func @transform_2(%arg0: i32) -> (i32, i32) {
    %c0_i32 = arith.constant 0 : i32
    %c0_i32_0 = arith.constant 0 : i32
    return %arg0, %c0_i32 : i32, i32
  }
  func.func @transform_3(%arg0: i32) -> (i32, i32) {
    %c0_i32 = arith.constant 0 : i32
    %c0_i32_0 = arith.constant 0 : i32
    %c0_i32_1 = arith.constant 0 : i32
    return %c0_i32, %c0_i32_0 : i32, i32
  }
  func.func @transform_4(%arg0: i32) -> (i32, i32) {
    %c0_i32 = arith.constant 0 : i32
    %c0_i32_0 = arith.constant 0 : i32
    %c0_i32_1 = arith.constant 0 : i32
    return %c0_i32, %c0_i32_0 : i32, i32
  }
  func.func @transform_5(%arg0: i32) -> (i32, i32) {
    %c0_i32 = arith.constant 0 : i32
    %c0_i32_0 = arith.constant 0 : i32
    %c0_i32_1 = arith.constant 0 : i32
    return %c0_i32, %c0_i32_0 : i32, i32
  }
  func.func @transform_6(%arg0: i32) -> (i32, i32) {
    %c0_i32 = arith.constant 0 : i32
    %c0_i32_0 = arith.constant 0 : i32
    %c0_i32_1 = arith.constant 0 : i32
    return %c0_i32, %c0_i32_0 : i32, i32
  }
  func.func @transform_7(%arg0: i32) -> (i32, i32) {
    %c0_i32 = arith.constant 0 : i32
    %c0_i32_0 = arith.constant 0 : i32
    return %arg0, %c0_i32 : i32, i32
  }
}

</mosaic_0001>

<llo_original>
// kernel: tpu_custom_call.1
$region0: #{tpu_custom_call.1}
  #allocation0 [shape = 'u32[]', space=smem, size = 0x4, offset = 0x4, fixed_abs, tag = 'smem constant byte address 0x4 - core index']
  #allocation1 [shape = 'u32[72,128]{1,0:T(1,128)}', space=vmem, size = 0x9000, scoped, tag = 'internal scratch']
  #allocation2 [shape = 'f32[1,1]{1,0:T(1,128)S(1)}', space=vmem, size = 0x200, scoped, tag = 'scoped memory for tpu_custom_call.1']
  %s0 = inlined_call_operand.vmem [shape: f32[64,32], index: 0, kind: input, shape index: {}]
  %s1 = inlined_call_operand.vmem [shape: f32[64,32], index: 1, kind: input, shape index: {}]
  %s2 = inlined_call_operand.vmem [shape: f32[64,32], index: 2, kind: input, shape index: {}]
  %s3 = inlined_call_operand.vmem [shape: f32[32,32], index: 3, kind: input, shape index: {}]
  %s4 = inlined_call_operand.vmem [shape: f32[1,32], index: 4, kind: input, shape index: {}]
  %s5 = inlined_call_operand.vmem [shape: f32[1,32], index: 5, kind: input, shape index: {}]
  %s6 = inlined_call_operand.<no memory space> [shape: f32[1,1], index: 6, kind: input, shape index: {}]
  %s7 = inlined_call_operand.hbm [shape: f32[16,128], index: 7, kind: output, shape index: {}]
  %s8 = sld [smem:[#allocation0]]
  $region61: #{tpu_custom_call.1} parent=0
    _
  %s10 = ssub.s32 1, %s8
  %s11 = scalar_select 0, %s10, %s8
  %v12 = vstv %s6
  %13 = vst [vmem:[#allocation2] sm:$0x1] %v12
  $region1: #{tpu_custom_call.1} parent=0
    #allocation3 [shape = 'u8[8192]{0}', space=vmem, size = 0x2000, scoped, tag = 'output window, operand 0']
    #allocation4 [shape = 's32[2]{0}', space=sflag, size = 0x8, scoped, tag = 'scoped memory for tpu_custom_call.1']
    %14 = vsyncpa [#allocation4], 0
    %s15 = scalar_lea.sflag [#allocation4], 1
    %16 = vsyncpa %s15, 0
    loop: start=0, step=1, limit=4
    $region2: #{tpu_custom_call.1} parent=1 // loop_pre_header
      _
    $region3: #{tpu_custom_call.1} parent=1 // loop_header
      %s18 = sphi 0, %s22
      %p19 = scmp.ge.s32.totalorder %s18, 4
      %s28 = sphi 0, %s30
      %s31 = sphi 0, %s28
      %s32 = sphi 0, %s31
      %s48 = sphi 0, %s32
      %s54 = sphi 0, %s56
      %s57 = sphi 0, %s54
      %s58 = sphi 0, %s57
      %s74 = sphi 0, %s58
      %s80 = sphi 0, %s82
      %s83 = sphi 0, %s80
      %s84 = sphi 0, %s83
      %s100 = sphi 0, %s84
      %s104 = sphi 0, %s104
      %s106 = sphi 0, %s104
      %s107 = sphi 0, %s106
      %s121 = sphi 0, %s107
      %s125 = sphi 0, %s125
      %s127 = sphi 0, %s125
      %s128 = sphi 0, %s127
      %s142 = sphi 0, %s128
      %s146 = sphi 0, %s146
      %s148 = sphi 0, %s146
      %s149 = sphi 0, %s148
      %s163 = sphi 0, %s149
      %s167 = sphi 0, %s167
      %s169 = sphi 0, %s167
      %s170 = sphi 0, %s169
      %s184 = sphi 0, %s170
      %s190 = sphi 0, %s192
      %s193 = sphi 0, %s190
      %s194 = sphi 0, %s193
      %s210 = sphi 0, %s194
    $region4: #{tpu_custom_call.1} parent=1 // loop_header_branch
      %21 = sbr.rel (%p19) target = $region8
    $region5: #{tpu_custom_call.1} parent=1 // loop_body
      %s23 = ssub.s32 %s18, 1
      %s24 = ssub.s32 %s18, 2
      %s25 = sadd.s32 %s18, 1
      %s26 = ssub.s32 %s18, %s25
      %p27 = scmp.eq.s32.totalorder %s26, 0
      %s29 = sadd.s32 %s28, 1
      %s30 = scalar_select %p27, %s28, %s29
      %p33 = pneg %p27
      %p34 = scmp.eq.s32.totalorder %s18, 1
      %p35 = por %p33, %p34
      %p36 = scmp.ne.s32.totalorder %s28, %s31
      %p37 = scmp.eq.s32.totalorder %s18, 0
      %p38 = por %p36, %p37
      %p39 = scmp.ne.s32.totalorder %s28, %s31
      %p40 = scmp.eq.s32.totalorder %s23, 1
      %p41 = por %p39, %p40
      %p42 = scmp.ne.s32.totalorder %s31, %s32
      %p43 = scmp.eq.s32.totalorder %s23, 0
      %p44 = por %p42, %p43
      %p45 = scmp.ne.s32.totalorder %s31, %s32
      %p46 = scmp.eq.s32.totalorder %s24, 1
      %p47 = por %p45, %p46
      %p49 = scmp.ne.s32.totalorder %s32, %s48
      %p50 = scmp.eq.s32.totalorder %s24, 0
      %p51 = por %p49, %p50
      %s52 = ssub.s32 %s18, %s25
      %p53 = scmp.eq.s32.totalorder %s52, 0
      %s55 = sadd.s32 %s54, 1
      %s56 = scalar_select %p53, %s54, %s55
      %p59 = pneg %p53
      %p60 = scmp.eq.s32.totalorder %s18, 1
      %p61 = por %p59, %p60
      %p62 = scmp.ne.s32.totalorder %s54, %s57
      %p63 = scmp.eq.s32.totalorder %s18, 0
      %p64 = por %p62, %p63
      %p65 = scmp.ne.s32.totalorder %s54, %s57
      %p66 = scmp.eq.s32.totalorder %s23, 1
      %p67 = por %p65, %p66
      %p68 = scmp.ne.s32.totalorder %s57, %s58
      %p69 = scmp.eq.s32.totalorder %s23, 0
      %p70 = por %p68, %p69
      %p71 = scmp.ne.s32.totalorder %s57, %s58
      %p72 = scmp.eq.s32.totalorder %s24, 1
      %p73 = por %p71, %p72
      %p75 = scmp.ne.s32.totalorder %s58, %s74
      %p76 = scmp.eq.s32.totalorder %s24, 0
      %p77 = por %p75, %p76
      %s78 = ssub.s32 %s18, %s25
      %p79 = scmp.eq.s32.totalorder %s78, 0
      %s81 = sadd.s32 %s80, 1
      %s82 = scalar_select %p79, %s80, %s81
      %p85 = pneg %p79
      %p86 = scmp.eq.s32.totalorder %s18, 1
      %p87 = por %p85, %p86
      %p88 = scmp.ne.s32.totalorder %s80, %s83
      %p89 = scmp.eq.s32.totalorder %s18, 0
      %p90 = por %p88, %p89
      %p91 = scmp.ne.s32.totalorder %s80, %s83
      %p92 = scmp.eq.s32.totalorder %s23, 1
      %p93 = por %p91, %p92
      %p94 = scmp.ne.s32.totalorder %s83, %s84
      %p95 = scmp.eq.s32.totalorder %s23, 0
      %p96 = por %p94, %p95
      %p97 = scmp.ne.s32.totalorder %s83, %s84
      %p98 = scmp.eq.s32.totalorder %s24, 1
      %p99 = por %p97, %p98
      %p101 = scmp.ne.s32.totalorder %s84, %s100
      %p102 = scmp.eq.s32.totalorder %s24, 0
      %p103 = por %p101, %p102
      %s105 = sadd.s32 %s104, 1
      %p108 = scmp.eq.s32.totalorder %s18, 1
      %p109 = scmp.ne.s32.totalorder %s104, %s106
      %p110 = scmp.eq.s32.totalorder %s18, 0
      %p111 = por %p109, %p110
      %p112 = scmp.ne.s32.totalorder %s104, %s106
      %p113 = scmp.eq.s32.totalorder %s23, 1
      %p114 = por %p112, %p113
      %p115 = scmp.ne.s32.totalorder %s106, %s107
      %p116 = scmp.eq.s32.totalorder %s23, 0
      %p117 = por %p115, %p116
      %p118 = scmp.ne.s32.totalorder %s106, %s107
      %p119 = scmp.eq.s32.totalorder %s24, 1
      %p120 = por %p118, %p119
      %p122 = scmp.ne.s32.totalorder %s107, %s121
      %p123 = scmp.eq.s32.totalorder %s24, 0
      %p124 = por %p122, %p123
      %s126 = sadd.s32 %s125, 1
      %p129 = scmp.eq.s32.totalorder %s18, 1
      %p130 = scmp.ne.s32.totalorder %s125, %s127
      %p131 = scmp.eq.s32.totalorder %s18, 0
      %p132 = por %p130, %p131
      %p133 = scmp.ne.s32.totalorder %s125, %s127
      %p134 = scmp.eq.s32.totalorder %s23, 1
      %p135 = por %p133, %p134
      %p136 = scmp.ne.s32.totalorder %s127, %s128
      %p137 = scmp.eq.s32.totalorder %s23, 0
      %p138 = por %p136, %p137
      %p139 = scmp.ne.s32.totalorder %s127, %s128
      %p140 = scmp.eq.s32.totalorder %s24, 1
      %p141 = por %p139, %p140
      %p143 = scmp.ne.s32.totalorder %s128, %s142
      %p144 = scmp.eq.s32.totalorder %s24, 0
      %p145 = por %p143, %p144
      %s147 = sadd.s32 %s146, 1
      %p150 = scmp.eq.s32.totalorder %s18, 1
      %p151 = scmp.ne.s32.totalorder %s146, %s148
      %p152 = scmp.eq.s32.totalorder %s18, 0
      %p153 = por %p151, %p152
      %p154 = scmp.ne.s32.totalorder %s146, %s148
      %p155 = scmp.eq.s32.totalorder %s23, 1
      %p156 = por %p154, %p155
      %p157 = scmp.ne.s32.totalorder %s148, %s149
      %p158 = scmp.eq.s32.totalorder %s23, 0
      %p159 = por %p157, %p158
      %p160 = scmp.ne.s32.totalorder %s148, %s149
      %p161 = scmp.eq.s32.totalorder %s24, 1
      %p162 = por %p160, %p161
      %p164 = scmp.ne.s32.totalorder %s149, %s163
      %p165 = scmp.eq.s32.totalorder %s24, 0
      %p166 = por %p164, %p165
      %s168 = sadd.s32 %s167, 1
      %p171 = scmp.eq.s32.totalorder %s18, 1
      %p172 = scmp.ne.s32.totalorder %s167, %s169
      %p173 = scmp.eq.s32.totalorder %s18, 0
      %p174 = por %p172, %p173
      %p175 = scmp.ne.s32.totalorder %s167, %s169
      %p176 = scmp.eq.s32.totalorder %s23, 1
      %p177 = por %p175, %p176
      %p178 = scmp.ne.s32.totalorder %s169, %s170
      %p179 = scmp.eq.s32.totalorder %s23, 0
      %p180 = por %p178, %p179
      %p181 = scmp.ne.s32.totalorder %s169, %s170
      %p182 = scmp.eq.s32.totalorder %s24, 1
      %p183 = por %p181, %p182
      %p185 = scmp.ne.s32.totalorder %s170, %s184
      %p186 = scmp.eq.s32.totalorder %s24, 0
      %p187 = por %p185, %p186
      %s188 = ssub.s32 %s18, %s25
      %p189 = scmp.eq.s32.totalorder %s188, 0
      %s191 = sadd.s32 %s190, 1
      %s192 = scalar_select %p189, %s190, %s191
      %p195 = pneg %p189
      %p196 = scmp.eq.s32.totalorder %s18, 1
      %p197 = por %p195, %p196
      %p198 = scmp.ne.s32.totalorder %s190, %s193
      %p199 = scmp.eq.s32.totalorder %s18, 0
      %p200 = por %p198, %p199
      %p201 = scmp.ne.s32.totalorder %s190, %s193
      %p202 = scmp.eq.s32.totalorder %s23, 1
      %p203 = por %p201, %p202
      %p204 = scmp.ne.s32.totalorder %s193, %s194
      %p205 = scmp.eq.s32.totalorder %s23, 0
      %p206 = por %p204, %p205
      %p207 = scmp.ne.s32.totalorder %s193, %s194
      %p208 = scmp.eq.s32.totalorder %s24, 1
      %p209 = por %p207, %p208
      %p211 = scmp.ne.s32.totalorder %s194, %s210
      %p212 = scmp.eq.s32.totalorder %s24, 0
      %p213 = por %p211, %p212
      %p214 = scmp.le.s32.totalorder 1, %s18
      %p215 = scmp.lt.s32.totalorder %s18, 3
      %p216 = pnand %p214, %p215
      %p217 = pneg %p216
      // Predicated region
      $region9: #{tpu_custom_call.1} parent=5 // pred_check
        _
      $region10: #{tpu_custom_call.1} parent=5 // pred_check_branch
        %219 = sbr.rel (%p216) target = $region12
      $region11: #{tpu_custom_call.1} parent=5 // pred_region
        %s220 = ssub.s32 %s18, 1
        // Predicated region
        $region13: #{tpu_custom_call.1} parent=11 // pred_check
          %p221 = pneg %p117
        $region14: #{tpu_custom_call.1} parent=11 // pred_check_branch
          %223 = sbr.rel (%p221) target = $region16
        $region15: #{tpu_custom_call.1} parent=11 // pred_region
          _
        $region16: #{tpu_custom_call.1} parent=11 // pred_fallthru
          _
        // Predicated region
        $region17: #{tpu_custom_call.1} parent=11 // pred_check
          %p224 = pneg %p138
        $region18: #{tpu_custom_call.1} parent=11 // pred_check_branch
          %226 = sbr.rel (%p224) target = $region20
        $region19: #{tpu_custom_call.1} parent=11 // pred_region
          _
        $region20: #{tpu_custom_call.1} parent=11 // pred_fallthru
          _
        // Predicated region
        $region21: #{tpu_custom_call.1} parent=11 // pred_check
          %p227 = pneg %p159
        $region22: #{tpu_custom_call.1} parent=11 // pred_check_branch
          %229 = sbr.rel (%p227) target = $region24
        $region23: #{tpu_custom_call.1} parent=11 // pred_region
          _
        $region24: #{tpu_custom_call.1} parent=11 // pred_fallthru
          _
        // Predicated region
        $region25: #{tpu_custom_call.1} parent=11 // pred_check
          %p230 = pneg %p180
        $region26: #{tpu_custom_call.1} parent=11 // pred_check_branch
          %232 = sbr.rel (%p230) target = $region28
        $region27: #{tpu_custom_call.1} parent=11 // pred_region
          _
        $region28: #{tpu_custom_call.1} parent=11 // pred_fallthru
          _
      $region12: #{tpu_custom_call.1} parent=5 // pred_fallthru
        _
      %p233 = scmp.lt.s32.totalorder %s18, 2
      // Predicated region
      $region29: #{tpu_custom_call.1} parent=5 // pred_check
        %p234 = pneg %p233
      $region30: #{tpu_custom_call.1} parent=5 // pred_check_branch
        %236 = sbr.rel (%p234) target = $region32
      $region31: #{tpu_custom_call.1} parent=5 // pred_region
        // Predicated region
        $region33: #{tpu_custom_call.1} parent=31 // pred_check
          %p237 = pneg %p38
        $region34: #{tpu_custom_call.1} parent=31 // pred_check_branch
          %239 = sbr.rel (%p237) target = $region36
        $region35: #{tpu_custom_call.1} parent=31 // pred_region
          %s240 = smul.u32 4, %s18
          %p241 = scmp.lt.s32.totalorder %s240, 7
          %s242 = scalar_select %p241, %s240, 7
          %s243 = smul.addr %s242, 8
          %s244 = scalar_lea.vmem %s0, %s243
          %s245 = smul.u32 4, %s18
        $region36: #{tpu_custom_call.1} parent=31 // pred_fallthru
          _
        // Predicated region
        $region37: #{tpu_custom_call.1} parent=31 // pred_check
          %p246 = pneg %p64
        $region38: #{tpu_custom_call.1} parent=31 // pred_check_branch
          %248 = sbr.rel (%p246) target = $region40
        $region39: #{tpu_custom_call.1} parent=31 // pred_region
          %s249 = smul.u32 4, %s18
          %p250 = scmp.lt.s32.totalorder %s249, 7
          %s251 = scalar_select %p250, %s249, 7
          %s252 = smul.addr %s251, 8
          %s253 = scalar_lea.vmem %s1, %s252
          %s254 = smul.u32 4, %s18
        $region40: #{tpu_custom_call.1} parent=31 // pred_fallthru
          _
        // Predicated region
        $region41: #{tpu_custom_call.1} parent=31 // pred_check
          %p255 = pneg %p90
        $region42: #{tpu_custom_call.1} parent=31 // pred_check_branch
          %257 = sbr.rel (%p255) target = $region44
        $region43: #{tpu_custom_call.1} parent=31 // pred_region
          %s258 = smul.u32 4, %s18
          %p259 = scmp.lt.s32.totalorder %s258, 7
          %s260 = scalar_select %p259, %s258, 7
          %s261 = smul.addr %s260, 8
          %s262 = scalar_lea.vmem %s2, %s261
          %s263 = smul.u32 4, %s18
        $region44: #{tpu_custom_call.1} parent=31 // pred_fallthru
          _
      $region32: #{tpu_custom_call.1} parent=5 // pred_fallthru
        _
      %p264 = scmp.le.s32.totalorder 1, %s18
      %p265 = scmp.lt.s32.totalorder %s18, 3
      %p266 = pnand %p264, %p265
      %p267 = pneg %p266
      // Predicated region
      $region45: #{tpu_custom_call.1} parent=5 // pred_check
        _
      $region46: #{tpu_custom_call.1} parent=5 // pred_check_branch
        %269 = sbr.rel (%p266) target = $region48
      $region47: #{tpu_custom_call.1} parent=5 // pred_region
        %s270 = ssub.s32 %s18, 1
        %s271 = smul.u32 4, %s23
        %p272 = scmp.lt.s32.totalorder %s271, 7
        %s273 = scalar_select %p272, %s271, 7
        %s274 = smul.addr %s273, 8
        %s275 = scalar_lea.vmem %s0, %s274
        %p276 = pneg %p44
        %p277 = pneg %p41
        %s278 = smul.u32 4, %s23
        %p279 = scmp.lt.s32.totalorder %s278, 7
        %s280 = scalar_select %p279, %s278, 7
        %s281 = smul.addr %s280, 8
        %s282 = scalar_lea.vmem %s1, %s281
        %p283 = pneg %p70
        %p284 = pneg %p67
        %s285 = smul.u32 4, %s23
        %p286 = scmp.lt.s32.totalorder %s285, 7
        %s287 = scalar_select %p286, %s285, 7
        %s288 = smul.addr %s287, 8
        %s289 = scalar_lea.vmem %s2, %s288
        %p290 = pneg %p96
        %p291 = pneg %p93
        %p292 = pneg %p117
        %p293 = pneg %p114
        %p294 = pneg %p138
        %p295 = pneg %p135
        %p296 = pneg %p159
        %p297 = pneg %p156
        %p298 = pneg %p180
        %p299 = pneg %p177
        %p300 = pneg %p206
        %p301 = pneg %p203
        %s302 = sand.u32 %s193, 1
        %s303 = scalar_lea.sflag [#allocation4], %s302
        %s304 = sand.u32 %s193, 1
        %s305 = smul.addr %s304, 8
        %s306 = scalar_lea.vmem [#allocation3], %s305
        %s307 = smul.u32 4, %s23
        %p308 = scmp.lt.s32.totalorder %s307, 7
        %s309 = scalar_select %p308, %s307, 7
        %s310 = smul.addr %s309, 8
        %s311 = scalar_lea.vmem %s0, %s310
        %s312 = smul.u32 4, %s23
        %s313 = smul.u32 4, %s23
        %p314 = scmp.lt.s32.totalorder %s313, 7
        %s315 = scalar_select %p314, %s313, 7
        %s316 = smul.addr %s315, 8
        %s317 = scalar_lea.vmem %s1, %s316
        %s318 = smul.u32 4, %s23
        %s319 = smul.u32 4, %s23
        %p320 = scmp.lt.s32.totalorder %s319, 7
        %s321 = scalar_select %p320, %s319, 7
        %s322 = smul.addr %s321, 8
        %s323 = scalar_lea.vmem %s2, %s322
        %s324 = smul.u32 4, %s23
        %v325 = vlaneseq
        %v326 = vshrl.u32 %v325, 7
        %v327 = vadd.s32 %v326, 8
        %v328 = vadd.s32 %v326, 16
        %v329 = vadd.s32 %v326, 24
        %s330 = smul.u32 %s23, 32
        %v331 = vstv %s330
        %v332 = vadd.s32 %v331, %v326
        %v333 = vadd.s32 %v331, %v327
        %v334 = vadd.s32 %v331, %v328
        %v335 = vadd.s32 %v331, %v329
        %vm336 = vcmp.lt.s32.totalorder %v332, 64
        %vm337 = vcmp.lt.s32.totalorder %v333, 64
        %vm338 = vcmp.lt.s32.totalorder %v334, 64
        %vm339 = vcmp.lt.s32.totalorder %v335, 64
        %v340 = vld [vmem:[%s311] sm:$0xff]
        %v341 = vld [vmem:[%s311 + $0x8] sm:$0xff]
        %v342 = vld [vmem:[%s311 + $0x10] sm:$0xff]
        %v343 = vld [vmem:[%s311 + $0x18] sm:$0xff]
        %v344 = vld [vmem:[%s317] sm:$0xff]
        %v345 = vld [vmem:[%s317 + $0x8] sm:$0xff]
        %v346 = vld [vmem:[%s317 + $0x10] sm:$0xff]
        %v347 = vld [vmem:[%s317 + $0x18] sm:$0xff]
        %v348 = vmul.f32 %v340, %v344
        %v349 = vmul.f32 %v341, %v345
        %v350 = vmul.f32 %v342, %v346
        %v351 = vmul.f32 %v343, %v347
        %v352 = vsel %vm336, 1, 0
        %v353 = vsel %vm337, 1, 0
        %v354 = vsel %vm338, 1, 0
        %v355 = vsel %vm339, 1, 0
        %vm356 = vcmp.eq.s32.totalorder %v352, 1
        %vm357 = vcmp.eq.s32.totalorder %v353, 1
        %vm358 = vcmp.eq.s32.totalorder %v354, 1
        %vm359 = vcmp.eq.s32.totalorder %v355, 1
        %v360 = vsel %vm356, %v348, 0.0
        %v361 = vsel %vm357, %v349, 0.0
        %v362 = vsel %vm358, %v350, 0.0
        %v363 = vsel %vm359, %v351, 0.0
        %v364 = vld [vmem:[%s323] sm:$0xff]
        %v365 = vld [vmem:[%s323 + $0x8] sm:$0xff]
        %v366 = vld [vmem:[%s323 + $0x10] sm:$0xff]
        %v367 = vld [vmem:[%s323 + $0x18] sm:$0xff]
        %v368 = vmul.f32 %v340, %v364
        %v369 = vmul.f32 %v341, %v365
        %v370 = vmul.f32 %v342, %v366
        %v371 = vmul.f32 %v343, %v367
        %v372 = vsel %vm356, %v368, 0.0
        %v373 = vsel %vm357, %v369, 0.0
        %v374 = vsel %vm358, %v370, 0.0
        %v375 = vsel %vm359, %v371, 0.0
        %v376 = vsub.f32 %v360, %v372
        %v377 = vsub.f32 %v361, %v373
        %v378 = vsub.f32 %v362, %v374
        %v379 = vsub.f32 %v363, %v375
        %vm380 = vcmask 261120
        %v381 = vsel %vm380, %v376, 0.0
        %382 = vadd.xlane.f32.xlu0 %v381
        %v383 = vpop.xlane.xlu0 %382
        %v384 = vsel %vm380, %v377, 0.0
        %385 = vadd.xlane.f32.xlu0 %v384
        %v386 = vpop.xlane.xlu0 %385
        %v387 = vsel %vm380, %v378, 0.0
        %388 = vadd.xlane.f32.xlu0 %v387
        %v389 = vpop.xlane.xlu0 %388
        %v390 = vsel %vm380, %v379, 0.0
        %391 = vadd.xlane.f32.xlu0 %v390
        %v392 = vpop.xlane.xlu0 %391
        %v393 = vsub.f32 0.0, %v383
        %v394 = vsub.f32 0.0, %v386
        %v395 = vsub.f32 0.0, %v389
        %v396 = vsub.f32 0.0, %v392
        %v397 = vmax.f32 %v393, 0.0
        %v398 = vmax.f32 %v394, 0.0
        %v399 = vmax.f32 %v395, 0.0
        %v400 = vmax.f32 %v396, 0.0
        %v401 = vand.u32 2147483647, %v393
        %v402 = vand.u32 2147483647, %v394
        %v403 = vand.u32 2147483647, %v395
        %v404 = vand.u32 2147483647, %v396
        %v405 = vsub.f32 0.0, %v401
        %v406 = vsub.f32 0.0, %v402
        %v407 = vsub.f32 0.0, %v403
        %v408 = vsub.f32 0.0, %v404
        %v409 = vmul.f32 %v405, 1.442695
        %v410 = vpow.pop %v409
        %v411 = vmul.f32 %v406, 1.442695
        %v412 = vpow.pop %v411
        %v413 = vmul.f32 %v407, 1.442695
        %v414 = vpow.pop %v413
        %v415 = vmul.f32 %v408, 1.442695
        %v416 = vpow.pop %v415
        %v417 = vadd.f32 %v410, 1.0
        %v418 = vadd.f32 %v412, 1.0
        %v419 = vadd.f32 %v414, 1.0
        %v420 = vadd.f32 %v416, 1.0
        %v421 = vlog2.pop %v417
        %v422 = vmul.f32 %v421, 0.6931472
        %v423 = vlog2.pop %v418
        %v424 = vmul.f32 %v423, 0.6931472
        %v425 = vlog2.pop %v419
        %v426 = vmul.f32 %v425, 0.6931472
        %v427 = vlog2.pop %v420
        %v428 = vmul.f32 %v427, 0.6931472
        %v429 = vadd.f32 %v397, %v422
        %v430 = vadd.f32 %v398, %v424
        %v431 = vadd.f32 %v399, %v426
        %v432 = vadd.f32 %v400, %v428
        %v433 = vsel %vm336, %v429, 0.0
        %v434 = vsel %vm337, %v430, 0.0
        %v435 = vsel %vm338, %v431, 0.0
        %v436 = vsel %vm339, %v432, 0.0
        %vm437 = vcmask 7168
        %v438 = vsel %vm437, %v433, 0.0
        %v439 = vsel %vm437, %v434, 0.0
        %v440 = vadd.f32 %v438, %v439
        %v441 = vsel %vm437, %v435, 0.0
        %v442 = vadd.f32 %v440, %v441
        %v443 = vsel %vm437, %v436, 0.0
        %v444 = vadd.f32 %v442, %v443
        %445 = vadd.xlane.f32.xlu0 %v444
        %v446 = vpop.xlane.xlu0 %445
        %v447 = vrot.slane %v446, 4
        %v448 = vadd.f32 %v446, %v447
        %v449 = vrot.slane %v448, 2
        %v450 = vadd.f32 %v448, %v449
        %v451 = vrot.slane %v450, 1
        %v452 = vadd.f32 %v450, %v451
        %s453 = vtos %v452
        %v454 = vmax.f32 %v360, 0.0
        %v455 = vmax.f32 %v361, 0.0
        %v456 = vmax.f32 %v362, 0.0
        %v457 = vmax.f32 %v363, 0.0
        %v458 = vmax.f32 %v372, 0.0
        %v459 = vmax.f32 %v373, 0.0
        %v460 = vmax.f32 %v374, 0.0
        %v461 = vmax.f32 %v375, 0.0
        %v462 = vld [vmem:[%s3] sm:$0xff]
        %v463 = vld [vmem:[%s3 + $0x8] sm:$0xff]
        %v464 = vld [vmem:[%s3 + $0x10] sm:$0xff]
        %v465 = vld [vmem:[%s3 + $0x18] sm:$0xff]
        %v466 = vld [vmem:[%s4] sm:$0x1]
        %v468 = vperm.slane %v466, 0
        %v471 = vsel %vm380, %v454, 0
        %v474 = vsel %vm380, %v455, 0
        %v477 = vsel %vm380, %v456, 0
        %v480 = vsel %vm380, %v457, 0
        %v483 = vsel %vm380, %v458, 0
        %v486 = vsel %vm380, %v459, 0
        %v489 = vsel %vm380, %v460, 0
        %v492 = vsel %vm380, %v461, 0
        %494 = vmatpush.msra.mxu0 0.0
        %495 = vmatpush.msra.mxu0 0.0
        %496 = vmatpush.msra.mxu0 0.0
        %497 = vmatpush.msra.mxu0 0.0
        %498 = vmatpush.msra.mxu0 0.0
        %499 = vmatpush.msra.mxu0 0.0
        %500 = vmatpush.msra.mxu0 0.0
        %501 = vmatpush.msra.mxu0 0.0
        %502 = vmatpush.msra.mxu0 0.0
        %503 = vmatpush.msra.mxu0 0.0
        %504 = vmatpush.msra.mxu0 0.0
        %505 = vmatpush.msra.mxu0 0.0
        %506 = vmatpush.msra.mxu0 %v465
        %507 = vmatpush.msra.mxu0 %v464
        %508 = vmatpush.msra.mxu0 %v463
        %509 = vmatpush.msra.mxu0 %v462
        %510 = vmatmul.f32.gmra.mxu0 %v471
        %v511 = vpop.f32.mrf.mxu0
        %v512 = vadd.f32 %v468, %v511
        %513 = vmatmul.f32.gmra.mxu0 %v474
        %v514 = vpop.f32.mrf.mxu0
        %v515 = vadd.f32 %v468, %v514
        %516 = vmatmul.f32.gmra.mxu0 %v477
        %v517 = vpop.f32.mrf.mxu0
        %v518 = vadd.f32 %v468, %v517
        %519 = vmatmul.f32.gmra.mxu0 %v480
        %v520 = vpop.f32.mrf.mxu0
        %v521 = vadd.f32 %v468, %v520
        %522 = vmatmul.f32.gmra.mxu0 %v483
        %v523 = vpop.f32.mrf.mxu0
        %v524 = vadd.f32 %v468, %v523
        %525 = vmatmul.f32.gmra.mxu0 %v486
        %v526 = vpop.f32.mrf.mxu0
        %v527 = vadd.f32 %v468, %v526
        %528 = vmatmul.f32.gmra.mxu0 %v489
        %v529 = vpop.f32.mrf.mxu0
        %v530 = vadd.f32 %v468, %v529
        %531 = vmatmul.f32.gmra.mxu0 %v492
        %v532 = vpop.f32.mrf.mxu0
        %v533 = vadd.f32 %v468, %v532
        %534 = vdwg.mxu0
        %v535 = vmax.f32 %v512, 0.0
        %v536 = vmax.f32 %v515, 0.0
        %v537 = vmax.f32 %v518, 0.0
        %v538 = vmax.f32 %v521, 0.0
        %v539 = vmax.f32 %v524, 0.0
        %v540 = vmax.f32 %v527, 0.0
        %v541 = vmax.f32 %v530, 0.0
        %v542 = vmax.f32 %v533, 0.0
        %v543 = vld [vmem:[%s5] sm:$0x1]
        %v545 = vperm.slane %v543, 0
        %v547 = vmul.f32 %v535, %v545
        %v548 = vmul.f32 %v536, %v545
        %v549 = vmul.f32 %v537, %v545
        %v550 = vmul.f32 %v538, %v545
        %v551 = vmul.f32 %v539, %v545
        %v552 = vmul.f32 %v540, %v545
        %v553 = vmul.f32 %v541, %v545
        %v554 = vmul.f32 %v542, %v545
        %v555 = vsel %vm380, %v547, 0.0
        %556 = vadd.xlane.f32.xlu0 %v555
        %v557 = vpop.xlane.xlu0 %556
        %v558 = vsel %vm380, %v548, 0.0
        %559 = vadd.xlane.f32.xlu0 %v558
        %v560 = vpop.xlane.xlu0 %559
        %v561 = vsel %vm380, %v549, 0.0
        %562 = vadd.xlane.f32.xlu0 %v561
        %v563 = vpop.xlane.xlu0 %562
        %v564 = vsel %vm380, %v550, 0.0
        %565 = vadd.xlane.f32.xlu0 %v564
        %v566 = vpop.xlane.xlu0 %565
        %v567 = vsel %vm380, %v551, 0.0
        %568 = vadd.xlane.f32.xlu0 %v567
        %v569 = vpop.xlane.xlu0 %568
        %v570 = vsel %vm380, %v552, 0.0
        %571 = vadd.xlane.f32.xlu0 %v570
        %v572 = vpop.xlane.xlu0 %571
        %v573 = vsel %vm380, %v553, 0.0
        %574 = vadd.xlane.f32.xlu0 %v573
        %v575 = vpop.xlane.xlu0 %574
        %v576 = vsel %vm380, %v554, 0.0
        %577 = vadd.xlane.f32.xlu0 %v576
        %v578 = vpop.xlane.xlu0 %577
        %v579 = vld [vmem:[#allocation2] sm:$0x1]
        %v581 = vperm.slane %v579, 0
        %v583 = vadd.f32 %v557, %v581
        %v584 = vadd.f32 %v560, %v581
        %v585 = vadd.f32 %v563, %v581
        %v586 = vadd.f32 %v566, %v581
        %v587 = vadd.f32 %v569, %v581
        %v588 = vadd.f32 %v572, %v581
        %v589 = vadd.f32 %v575, %v581
        %v590 = vadd.f32 %v578, %v581
        %v591 = vadd.s32 %v326, 32
        %v592 = vadd.s32 %v326, 40
        %v593 = vadd.s32 %v326, 48
        %v594 = vadd.s32 %v326, 56
        %vm595 = vcmp.lt.s32.totalorder %v326, 32
        %vm596 = vcmp.lt.s32.totalorder %v327, 32
        %vm597 = vcmp.lt.s32.totalorder %v328, 32
        %vm598 = vcmp.lt.s32.totalorder %v329, 32
        %vm599 = vcmp.lt.s32.totalorder %v591, 32
        %vm600 = vcmp.lt.s32.totalorder %v592, 32
        %vm601 = vcmp.lt.s32.totalorder %v593, 32
        %vm602 = vcmp.lt.s32.totalorder %v594, 32
        %v603 = vsub.f32 0.0, %v583
        %v604 = vsub.f32 0.0, %v584
        %v605 = vsub.f32 0.0, %v585
        %v606 = vsub.f32 0.0, %v586
        %v607 = vsub.f32 0.0, %v587
        %v608 = vsub.f32 0.0, %v588
        %v609 = vsub.f32 0.0, %v589
        %v610 = vsub.f32 0.0, %v590
        %v611 = vsel %vm595, %v603, %v583
        %v612 = vsel %vm596, %v604, %v584
        %v613 = vsel %vm597, %v605, %v585
        %v614 = vsel %vm598, %v606, %v586
        %v615 = vsel %vm599, %v607, %v587
        %v616 = vsel %vm600, %v608, %v588
        %v617 = vsel %vm601, %v609, %v589
        %v618 = vsel %vm602, %v610, %v590
        %v619 = vmax.f32 %v611, 0.0
        %v620 = vmax.f32 %v612, 0.0
        %v621 = vmax.f32 %v613, 0.0
        %v622 = vmax.f32 %v614, 0.0
        %v623 = vmax.f32 %v615, 0.0
        %v624 = vmax.f32 %v616, 0.0
        %v625 = vmax.f32 %v617, 0.0
        %v626 = vmax.f32 %v618, 0.0
        %v627 = vand.u32 2147483647, %v611
        %v628 = vand.u32 2147483647, %v612
        %v629 = vand.u32 2147483647, %v613
        %v630 = vand.u32 2147483647, %v614
        %v631 = vand.u32 2147483647, %v615
        %v632 = vand.u32 2147483647, %v616
        %v633 = vand.u32 2147483647, %v617
        %v634 = vand.u32 2147483647, %v618
        %v635 = vsub.f32 0.0, %v627
        %v636 = vsub.f32 0.0, %v628
        %v637 = vsub.f32 0.0, %v629
        %v638 = vsub.f32 0.0, %v630
        %v639 = vsub.f32 0.0, %v631
        %v640 = vsub.f32 0.0, %v632
        %v641 = vsub.f32 0.0, %v633
        %v642 = vsub.f32 0.0, %v634
        %v643 = vmul.f32 %v635, 1.442695
        %v644 = vpow.pop %v643
        %v645 = vmul.f32 %v636, 1.442695
        %v646 = vpow.pop %v645
        %v647 = vmul.f32 %v637, 1.442695
        %v648 = vpow.pop %v647
        %v649 = vmul.f32 %v638, 1.442695
        %v650 = vpow.pop %v649
        %v651 = vmul.f32 %v639, 1.442695
        %v652 = vpow.pop %v651
        %v653 = vmul.f32 %v640, 1.442695
        %v654 = vpow.pop %v653
        %v655 = vmul.f32 %v641, 1.442695
        %v656 = vpow.pop %v655
        %v657 = vmul.f32 %v642, 1.442695
        %v658 = vpow.pop %v657
        %v659 = vadd.f32 %v644, 1.0
        %v660 = vadd.f32 %v646, 1.0
        %v661 = vadd.f32 %v648, 1.0
        %v662 = vadd.f32 %v650, 1.0
        %v663 = vadd.f32 %v652, 1.0
        %v664 = vadd.f32 %v654, 1.0
        %v665 = vadd.f32 %v656, 1.0
        %v666 = vadd.f32 %v658, 1.0
        %v667 = vlog2.pop %v659
        %v668 = vmul.f32 %v667, 0.6931472
        %v669 = vlog2.pop %v660
        %v670 = vmul.f32 %v669, 0.6931472
        %v671 = vlog2.pop %v661
        %v672 = vmul.f32 %v671, 0.6931472
        %v673 = vlog2.pop %v662
        %v674 = vmul.f32 %v673, 0.6931472
        %v675 = vlog2.pop %v663
        %v676 = vmul.f32 %v675, 0.6931472
        %v677 = vlog2.pop %v664
        %v678 = vmul.f32 %v677, 0.6931472
        %v679 = vlog2.pop %v665
        %v680 = vmul.f32 %v679, 0.6931472
        %v681 = vlog2.pop %v666
        %v682 = vmul.f32 %v681, 0.6931472
        %v683 = vadd.f32 %v619, %v668
        %v684 = vadd.f32 %v620, %v670
        %v685 = vadd.f32 %v621, %v672
        %v686 = vadd.f32 %v622, %v674
        %v687 = vadd.f32 %v623, %v676
        %v688 = vadd.f32 %v624, %v678
        %v689 = vadd.f32 %v625, %v680
        %v690 = vadd.f32 %v626, %v682
        %v691 = vmin.f32 %v683, 100.0
        %v692 = vmin.f32 %v684, 100.0
        %v693 = vmin.f32 %v685, 100.0
        %v694 = vmin.f32 %v686, 100.0
        %v695 = vmin.f32 %v687, 100.0
        %v696 = vmin.f32 %v688, 100.0
        %v697 = vmin.f32 %v689, 100.0
        %v698 = vmin.f32 %v690, 100.0
        %v699 = vsub.s32 %v326, 32
        %v700 = vsub.s32 %v327, 32
        %v701 = vsub.s32 %v328, 32
        %v702 = vsub.s32 %v329, 32
        %v703 = vsub.s32 %v592, 32
        %v704 = vsub.s32 %v593, 32
        %v705 = vsub.s32 %v594, 32
        %v706 = vsel %vm595, %v326, %v699
        %v707 = vsel %vm596, %v327, %v700
        %v708 = vsel %vm597, %v328, %v701
        %v709 = vsel %vm598, %v329, %v702
        %v710 = vsel %vm599, %v591, %v326
        %v711 = vsel %vm600, %v592, %v703
        %v712 = vsel %vm601, %v593, %v704
        %v713 = vsel %vm602, %v594, %v705
        %v714 = vadd.s32 %v331, %v706
        %v715 = vadd.s32 %v331, %v707
        %v716 = vadd.s32 %v331, %v708
        %v717 = vadd.s32 %v331, %v709
        %v718 = vadd.s32 %v331, %v710
        %v719 = vadd.s32 %v331, %v711
        %v720 = vadd.s32 %v331, %v712
        %v721 = vadd.s32 %v331, %v713
        %vm722 = vcmp.lt.s32.totalorder %v714, 64
        %vm723 = vcmp.lt.s32.totalorder %v715, 64
        %vm724 = vcmp.lt.s32.totalorder %v716, 64
        %vm725 = vcmp.lt.s32.totalorder %v717, 64
        %vm726 = vcmp.lt.s32.totalorder %v718, 64
        %vm727 = vcmp.lt.s32.totalorder %v719, 64
        %vm728 = vcmp.lt.s32.totalorder %v720, 64
        %vm729 = vcmp.lt.s32.totalorder %v721, 64
        %v730 = vsel %vm722, %v691, 0.0
        %v731 = vsel %vm723, %v692, 0.0
        %v732 = vsel %vm724, %v693, 0.0
        %v733 = vsel %vm725, %v694, 0.0
        %v734 = vsel %vm726, %v695, 0.0
        %v735 = vsel %vm727, %v696, 0.0
        %v736 = vsel %vm728, %v697, 0.0
        %v737 = vsel %vm729, %v698, 0.0
        %v738 = vsel %vm437, %v730, 0.0
        %v739 = vsel %vm437, %v731, 0.0
        %v740 = vadd.f32 %v738, %v739
        %v741 = vsel %vm437, %v732, 0.0
        %v742 = vadd.f32 %v740, %v741
        %v743 = vsel %vm437, %v733, 0.0
        %v744 = vadd.f32 %v742, %v743
        %v745 = vsel %vm437, %v734, 0.0
        %v746 = vadd.f32 %v744, %v745
        %v747 = vsel %vm437, %v735, 0.0
        %v748 = vadd.f32 %v746, %v747
        %v749 = vsel %vm437, %v736, 0.0
        %v750 = vadd.f32 %v748, %v749
        %v751 = vsel %vm437, %v737, 0.0
        %v752 = vadd.f32 %v750, %v751
        %753 = vadd.xlane.f32.xlu0 %v752
        %v754 = vpop.xlane.xlu0 %753
        %v755 = vrot.slane %v754, 4
        %v756 = vadd.f32 %v754, %v755
        %v757 = vrot.slane %v756, 2
        %v758 = vadd.f32 %v756, %v757
        %v759 = vrot.slane %v758, 1
        %v760 = vadd.f32 %v758, %v759
        %s761 = vtos %v760
        %v762 = vlaneseq
        %v763 = vand.u32 %v762, 127
        %vm764 = vcmp.eq.s32.totalorder %v326, 0
        %vm765 = vcmp.eq.s32.totalorder %v763, 0
        %vm766 = vmand %vm764, %vm765
        %v767 = vstv %s761
        %v768 = vsel %vm766, %v767, 0.0
        %vm769 = vcmp.eq.s32.totalorder %v763, 1
        %vm770 = vmand %vm764, %vm769
        %v771 = vstv %s453
        %v772 = vsel %vm770, %v771, %v768
        %773 = vst [vmem:[%s306] sm:$0xff] %v772
        %s774 = sand.u32 %s193, 1
        %s775 = scalar_lea.sflag [#allocation4], %s774
        %s776 = sand.u32 %s193, 1
        %s777 = smul.addr %s776, 8
        %s778 = scalar_lea.vmem [#allocation3], %s777
        // Predicated region
        $region49: #{tpu_custom_call.1} parent=47 // pred_check
          %p779 = pneg %p203
        $region50: #{tpu_custom_call.1} parent=47 // pred_check_branch
          %781 = sbr.rel (%p779) target = $region52
        $region51: #{tpu_custom_call.1} parent=47 // pred_region
          %783 = vsyncadd %s775, 0
          %s784 = smul.addr %s23, 8
          %s785 = scalar_lea.hbm %s7, %s784
          %s787 = sshll.u32 %s778, 4
          %s788 = int_to_ptr.vmem [resolvable:$true] %s787
          %s789 = sshll.u32 %s785, 4
          %s790 = int_to_ptr.hbm [resolvable:$true] %s789
          %792 = dma.vmem_to_hbm [thread:$0]  %s788, 128, %s790, %s775
        $region52: #{tpu_custom_call.1} parent=47 // pred_fallthru
          _
      $region48: #{tpu_custom_call.1} parent=5 // pred_fallthru
        _
      %p793 = scmp.le.s32.totalorder 2, %s18
      // Predicated region
      $region53: #{tpu_custom_call.1} parent=5 // pred_check
        %p794 = pneg %p793
      $region54: #{tpu_custom_call.1} parent=5 // pred_check_branch
        %796 = sbr.rel (%p794) target = $region56
      $region55: #{tpu_custom_call.1} parent=5 // pred_region
        %s797 = ssub.s32 %s18, 2
        // Predicated region
        $region57: #{tpu_custom_call.1} parent=55 // pred_check
          %p798 = pneg %p209
        $region58: #{tpu_custom_call.1} parent=55 // pred_check_branch
          %800 = sbr.rel (%p798) target = $region60
        $region59: #{tpu_custom_call.1} parent=55 // pred_region
          %s801 = sand.u32 %s194, 1
          %s802 = scalar_lea.sflag [#allocation4], %s801
          %s803 = sand.u32 %s194, 1
          %s804 = smul.addr %s803, 8
          %s805 = scalar_lea.vmem [#allocation3], %s804
          %807 = dma.done %s802, 128
        $region60: #{tpu_custom_call.1} parent=55 // pred_fallthru
          _
      $region56: #{tpu_custom_call.1} parent=5 // pred_fallthru
        _
    $region6: #{tpu_custom_call.1} parent=1 // loop_footer
      %s22 = sadd.s32 1, %s18
    $region7: #{tpu_custom_call.1} parent=1 // loop_footer_branch
      %17 = sbr.rel target = $region3
    $region8: #{tpu_custom_call.1} parent=1 // loop_exit
      _
    %808 = vsyncpa [#allocation4], 1
    %s809 = scalar_lea.sflag [#allocation4], 1
    %810 = vsyncpa %s809, 1

</llo_original>
